<compile_context>
chip_gen: v7x
topology: tpu7x:2x2x1
jax: 0.10.0
libtpu: 0.0.40
codegen_flags: <defaults>
</compile_context>

<pallas_src>
import functools

import jax
import jax.numpy as jnp
from jax import lax
from jax.experimental import pallas as pl
from jax.experimental.pallas import tpu as pltpu


def _rnn_wavefront_kernel(num_layers, T, Bp,
                          x_ref, wih0_ref, wbig_ref, b_ref, wout_ref, bout_ref,
                          out_ref):
    """Wavefront RNN forward.

    Packed state layout: packed[:, l*H:(l+1)*H] holds layer l's hidden state.
    At wavefront step s, layer l advances to time t = s - l, so the serial
    dependency chain is T + L - 1 matmul->tanh hops instead of T * L.

    wbig is block-structured (L*H, L*H):
        block (l, l)   = W_hh_l^T   (recurrence)
        block (l-1, l) = W_ih_l^T   (input from the layer below), l >= 1
    so a single packed_prev @ wbig yields both terms for every active layer.
    """
    LH = wbig_ref.shape[0]
    H = LH // num_layers

    # All T layer-0 input projections in ONE batched matmul.  Independent of the
    # recurrence -> stays off the serial critical path.  Columns outside block 0
    # of wih0_ref are zero, so the result adds cleanly to the packed state.
    xp = jnp.dot(x_ref[...], wih0_ref[...],
                 preferred_element_type=jnp.float32)              # (T*Bp, LH)

    wbig = wbig_ref[...]       # hoisted: loaded once, reused every wavefront step
    b = b_ref[...]             # (1, LH) combined b_ih + b_hh per layer
    # TODO(synk): hold wbig in the MXU weight staging registers across the loop
    # (pltpu.matmul_push_rhs / matmul_acc_lhs / matmul_pop); on v7x additionally
    # accumulate xp[t] + b in place via the MRB instead of the VPU add.

    packed = jnp.zeros((Bp, LH), jnp.float32)
    num_steps = T + num_layers - 1
    # T and L are small & static -> fully unrolled serial recurrence.
    # TODO(synk): if T / H grow, switch to lax.fori_loop(..., unroll=True) chunks.
    for s in range(num_steps):
        pre = jnp.dot(packed, wbig, preferred_element_type=jnp.float32) + b
        if s < T:
            # Sublane-aligned static slice (Bp is a multiple of 8).
            pre = pre + xp[s * Bp:(s + 1) * Bp, :]
        packed = jnp.tanh(pre)
        if s < num_layers - 1:
            # Layers l > s have not started yet: keep their h_{-1} at exactly 0.
            col = lax.broadcasted_iota(jnp.int32, (Bp, LH), 1)
            packed = jnp.where(col < (s + 1) * H, packed, 0.0)

    # Dropouts have p=0.0 -> identity; nothing to apply.
    # Linear(H -> 1) head on the last layer's final hidden state, done as a VPU
    # multiply + cross-lane reduce (wout_ref is zero outside the last block)
    # instead of a 1-lane-wide MXU matmul at the very tail of the latency chain.
    out = jnp.sum(packed * wout_ref[...], axis=-1, keepdims=True) + bout_ref[...]
    out_ref[...] = out.astype(out_ref.dtype)


def _pack_params(layer_params, wout_T, data_dim_padded):
    """Build the wavefront-packed weights (runs fused inside the jitted wrapper)."""
    num_layers = len(layer_params)
    H = layer_params[0][1].shape[0]
    LH = num_layers * H
    wih0_T = layer_params[0][0]
    D = wih0_T.shape[0]

    wih0_pad = jnp.zeros((data_dim_padded, LH), jnp.float32).at[:D, :H].set(wih0_T)
    wbig = jnp.zeros((LH, LH), jnp.float32)
    b_packed = jnp.zeros((1, LH), jnp.float32)
    for l, (wih_T, whh_T, b) in enumerate(layer_params):
        wbig = wbig.at[l * H:(l + 1) * H, l * H:(l + 1) * H].set(whh_T)
        if l > 0:
            wbig = wbig.at[(l - 1) * H:l * H, l * H:(l + 1) * H].set(wih_T)
        b_packed = b_packed.at[:, l * H:(l + 1) * H].set(b)
    wout_pad = jnp.zeros((1, LH), jnp.float32).at[:, (num_layers - 1) * H:].set(
        wout_T.reshape(1, H))
    return wih0_pad, wbig, b_packed, wout_pad


@jax.jit
def forecasting_model_forward(x, layer_params, wout_T, bout):
    """x: (B, T, D) float32.  layer_params: list of (wih_T, whh_T, b_ih + b_hh) per layer."""
    B, T, D = x.shape
    num_layers = len(layer_params)
    H = layer_params[0][1].shape[0]

    # Pad the batch to a full sublane group (>= 8, multiple of 8) and the contraction
    # dim to a multiple of 8; padded rows/cols are zeros and are sliced off / inert.
    Bp = max(8, ((B + 7) // 8) * 8)
    Dp = max(8, ((D + 7) // 8) * 8)
    x_pad = jnp.zeros((Bp, T, Dp), jnp.float32).at[:B, :, :D].set(x)
    # Time-major flat layout: each time step is a contiguous, sublane-aligned Bp-row block.
    x2d = jnp.transpose(x_pad, (1, 0, 2)).reshape(T * Bp, Dp)

    wih0_pad, wbig, b_packed, wout_pad = _pack_params(layer_params, wout_T, Dp)

    vmem = pl.BlockSpec(memory_space=pltpu.MemorySpace.VMEM)
    out_full = pl.pallas_call(
        functools.partial(_rnn_wavefront_kernel, num_layers, T, Bp),
        out_shape=jax.ShapeDtypeStruct((Bp, 1), jnp.float32),
        in_specs=[vmem] * 6,
        out_specs=vmem,
        compiler_params=pltpu.CompilerParams(
            # Explicit budget (review): whole model is a few KiB here, well under
            # v7x's 64 MiB physical VMEM; re-derive if H / T / num_layers grow.
            vmem_limit_bytes=32 * 1024 * 1024),
    )(x2d, wih0_pad, wbig, b_packed, wout_pad, bout)

    # TODO(synk): for large real batches, grid over batch blocks with
    # dimension_semantics=("parallel",) so v7x's second TensorCore shares the work,
    # and cast matmul operands to bf16 (f32 accumulation) for large H on v5e/v6e.
    return out_full[:B]


def _reference_forward(x, layer_params, wout_T, bout):
    """Pure-JAX reference of the same forward pass (for a sanity check)."""
    B, T, _ = x.shape
    seq = x.astype(jnp.float32)
    for (wih_T, whh_T, b) in layer_params:
        H = whh_T.shape[0]
        h = jnp.zeros((B, H), jnp.float32)
        outs = []
        for t in range(T):
            h = jnp.tanh(seq[:, t, :] @ wih_T + h @ whh_T + b)
            outs.append(h)
        seq = jnp.stack(outs, axis=1)
    return seq[:, -1, :] @ wout_T + bout


def init_params(key, data_dim, hidden_dim, num_layers):
    """Deterministic synthetic parameters (PyTorch-style uniform(-1/sqrt(H), 1/sqrt(H)))."""
    scale = 1.0 / jnp.sqrt(jnp.float32(hidden_dim))
    layer_params = []
    in_dim = data_dim
    for _ in range(num_layers):
        key, k1, k2, k3, k4 = jax.random.split(key, 5)
        wih_T = jax.random.uniform(k1, (in_dim, hidden_dim), jnp.float32, -scale, scale)
        whh_T = jax.random.uniform(k2, (hidden_dim, hidden_dim), jnp.float32, -scale, scale)
        b_ih = jax.random.uniform(k3, (1, hidden_dim), jnp.float32, -scale, scale)
        b_hh = jax.random.uniform(k4, (1, hidden_dim), jnp.float32, -scale, scale)
        layer_params.append((wih_T, whh_T, b_ih + b_hh))
        in_dim = hidden_dim
    key, k5, k6 = jax.random.split(key, 3)
    wout_T = jax.random.uniform(k5, (hidden_dim, 1), jnp.float32, -scale, scale)
    bout = jax.random.uniform(k6, (1, 1), jnp.float32, -scale, scale)
    return layer_params, wout_T, bout


if __name__ == "__main__":
    B, T, DATA_DIM, HIDDEN_DIM, NUM_LAYERS = 2, 8, 4, 32, 2

    key = jax.random.PRNGKey(0)
    key, xkey = jax.random.split(key)
    x = jax.random.normal(xkey, (B, T, DATA_DIM), dtype=jnp.float32)

    layer_params, wout_T, bout = init_params(key, DATA_DIM, HIDDEN_DIM, NUM_LAYERS)

    out = forecasting_model_forward(x, layer_params, wout_T, bout)
    out = jax.block_until_ready(out)

    ref = _reference_forward(x, layer_params, wout_T, bout)
    assert out.shape == (B, 1)
    assert jnp.allclose(out, ref, atol=1e-4, rtol=1e-4), (out, ref)

    print("KERNEL_OK")
</pallas_src>

<mosaic_0001>
module attributes {stable_mosaic.version = 11 : i64} {
  func.func @_rnn_wavefront_kernel(%arg0: memref<64x8xf32, #tpu.memory_space<vmem>>, %arg1: memref<8x64xf32, #tpu.memory_space<vmem>>, %arg2: memref<64x64xf32, #tpu.memory_space<vmem>>, %arg3: memref<1x64xf32, #tpu.memory_space<vmem>>, %arg4: memref<1x64xf32, #tpu.memory_space<vmem>>, %arg5: memref<1x1xf32, #tpu.memory_space<vmem>>, %arg6: memref<8x1xf32, #tpu.memory_space<vmem>>) attributes {dimension_semantics = [], scalar_prefetch = 0 : i64, scratch_operands = 0 : i64, tpu.core_type = #tpu.core_type<tc>} {
    %c0 = arith.constant 0 : index
    %c0_0 = arith.constant 0 : index
    %0 = vector.load %arg0[%c0, %c0_0] : memref<64x8xf32, #tpu.memory_space<vmem>>, vector<64x8xf32>
    %c0_1 = arith.constant 0 : index
    %c0_2 = arith.constant 0 : index
    %1 = vector.load %arg1[%c0_1, %c0_2] : memref<8x64xf32, #tpu.memory_space<vmem>>, vector<8x64xf32>
    %cst = arith.constant dense<0.000000e+00> : vector<64x64xf32>
    %2 = tpu.matmul %0, %1, %cst {dimension_numbers = #tpu.dot_dimension_numbers<[1], [0], [0], [1], [0, 0, 1, 1], [], []>} : vector<64x8xf32>, vector<8x64xf32>, vector<64x64xf32> -> vector<64x64xf32>
    %c0_3 = arith.constant 0 : index
    %c0_4 = arith.constant 0 : index
    %3 = vector.load %arg2[%c0_3, %c0_4] : memref<64x64xf32, #tpu.memory_space<vmem>>, vector<64x64xf32>
    %c0_5 = arith.constant 0 : index
    %c0_6 = arith.constant 0 : index
    %4 = vector.load %arg3[%c0_5, %c0_6] : memref<1x64xf32, #tpu.memory_space<vmem>>, vector<1x64xf32>
    %cst_7 = arith.constant 0.000000e+00 : f32
    %5 = vector.broadcast %cst_7 : f32 to vector<8x64xf32>
    %cst_8 = arith.constant dense<0.000000e+00> : vector<8x64xf32>
    %6 = tpu.matmul %5, %3, %cst_8 {dimension_numbers = #tpu.dot_dimension_numbers<[1], [0], [0], [1], [0, 0, 1, 1], [], []>} : vector<8x64xf32>, vector<64x64xf32>, vector<8x64xf32> -> vector<8x64xf32>
    %7 = vector.broadcast %4 : vector<1x64xf32> to vector<8x64xf32>
    %8 = arith.addf %6, %7 : vector<8x64xf32>
    %9 = vector.extract_strided_slice %2 {offsets = [0, 0], sizes = [8, 64], strides = [1, 1]} : vector<64x64xf32> to vector<8x64xf32>
    %10 = arith.addf %8, %9 : vector<8x64xf32>
    %11 = math.tanh %10 : vector<8x64xf32>
    %12 = tpu.iota {dimensions = array<i32: 1>} : vector<8x64xi32>
    %c32_i32 = arith.constant 32 : i32
    %13 = vector.broadcast %c32_i32 : i32 to vector<8x64xi32>
    %14 = arith.cmpi slt, %12, %13 : vector<8x64xi32>
    %cst_9 = arith.constant 0.000000e+00 : f32
    %15 = vector.broadcast %cst_9 : f32 to vector<8x64xf32>
    %16 = arith.select %14, %11, %15 : vector<8x64xi1>, vector<8x64xf32>
    %cst_10 = arith.constant dense<0.000000e+00> : vector<8x64xf32>
    %17 = tpu.matmul %16, %3, %cst_10 {dimension_numbers = #tpu.dot_dimension_numbers<[1], [0], [0], [1], [0, 0, 1, 1], [], []>} : vector<8x64xf32>, vector<64x64xf32>, vector<8x64xf32> -> vector<8x64xf32>
    %18 = vector.broadcast %4 : vector<1x64xf32> to vector<8x64xf32>
    %19 = arith.addf %17, %18 : vector<8x64xf32>
    %20 = vector.extract_strided_slice %2 {offsets = [8, 0], sizes = [8, 64], strides = [1, 1]} : vector<64x64xf32> to vector<8x64xf32>
    %21 = arith.addf %19, %20 : vector<8x64xf32>
    %22 = math.tanh %21 : vector<8x64xf32>
    %cst_11 = arith.constant dense<0.000000e+00> : vector<8x64xf32>
    %23 = tpu.matmul %22, %3, %cst_11 {dimension_numbers = #tpu.dot_dimension_numbers<[1], [0], [0], [1], [0, 0, 1, 1], [], []>} : vector<8x64xf32>, vector<64x64xf32>, vector<8x64xf32> -> vector<8x64xf32>
    %24 = vector.broadcast %4 : vector<1x64xf32> to vector<8x64xf32>
    %25 = arith.addf %23, %24 : vector<8x64xf32>
    %26 = vector.extract_strided_slice %2 {offsets = [16, 0], sizes = [8, 64], strides = [1, 1]} : vector<64x64xf32> to vector<8x64xf32>
    %27 = arith.addf %25, %26 : vector<8x64xf32>
    %28 = math.tanh %27 : vector<8x64xf32>
    %cst_12 = arith.constant dense<0.000000e+00> : vector<8x64xf32>
    %29 = tpu.matmul %28, %3, %cst_12 {dimension_numbers = #tpu.dot_dimension_numbers<[1], [0], [0], [1], [0, 0, 1, 1], [], []>} : vector<8x64xf32>, vector<64x64xf32>, vector<8x64xf32> -> vector<8x64xf32>
    %30 = vector.broadcast %4 : vector<1x64xf32> to vector<8x64xf32>
    %31 = arith.addf %29, %30 : vector<8x64xf32>
    %32 = vector.extract_strided_slice %2 {offsets = [24, 0], sizes = [8, 64], strides = [1, 1]} : vector<64x64xf32> to vector<8x64xf32>
    %33 = arith.addf %31, %32 : vector<8x64xf32>
    %34 = math.tanh %33 : vector<8x64xf32>
    %cst_13 = arith.constant dense<0.000000e+00> : vector<8x64xf32>
    %35 = tpu.matmul %34, %3, %cst_13 {dimension_numbers = #tpu.dot_dimension_numbers<[1], [0], [0], [1], [0, 0, 1, 1], [], []>} : vector<8x64xf32>, vector<64x64xf32>, vector<8x64xf32> -> vector<8x64xf32>
    %36 = vector.broadcast %4 : vector<1x64xf32> to vector<8x64xf32>
    %37 = arith.addf %35, %36 : vector<8x64xf32>
    %38 = vector.extract_strided_slice %2 {offsets = [32, 0], sizes = [8, 64], strides = [1, 1]} : vector<64x64xf32> to vector<8x64xf32>
    %39 = arith.addf %37, %38 : vector<8x64xf32>
    %40 = math.tanh %39 : vector<8x64xf32>
    %cst_14 = arith.constant dense<0.000000e+00> : vector<8x64xf32>
    %41 = tpu.matmul %40, %3, %cst_14 {dimension_numbers = #tpu.dot_dimension_numbers<[1], [0], [0], [1], [0, 0, 1, 1], [], []>} : vector<8x64xf32>, vector<64x64xf32>, vector<8x64xf32> -> vector<8x64xf32>
    %42 = vector.broadcast %4 : vector<1x64xf32> to vector<8x64xf32>
    %43 = arith.addf %41, %42 : vector<8x64xf32>
    %44 = vector.extract_strided_slice %2 {offsets = [40, 0], sizes = [8, 64], strides = [1, 1]} : vector<64x64xf32> to vector<8x64xf32>
    %45 = arith.addf %43, %44 : vector<8x64xf32>
    %46 = math.tanh %45 : vector<8x64xf32>
    %cst_15 = arith.constant dense<0.000000e+00> : vector<8x64xf32>
    %47 = tpu.matmul %46, %3, %cst_15 {dimension_numbers = #tpu.dot_dimension_numbers<[1], [0], [0], [1], [0, 0, 1, 1], [], []>} : vector<8x64xf32>, vector<64x64xf32>, vector<8x64xf32> -> vector<8x64xf32>
    %48 = vector.broadcast %4 : vector<1x64xf32> to vector<8x64xf32>
    %49 = arith.addf %47, %48 : vector<8x64xf32>
    %50 = vector.extract_strided_slice %2 {offsets = [48, 0], sizes = [8, 64], strides = [1, 1]} : vector<64x64xf32> to vector<8x64xf32>
    %51 = arith.addf %49, %50 : vector<8x64xf32>
    %52 = math.tanh %51 : vector<8x64xf32>
    %cst_16 = arith.constant dense<0.000000e+00> : vector<8x64xf32>
    %53 = tpu.matmul %52, %3, %cst_16 {dimension_numbers = #tpu.dot_dimension_numbers<[1], [0], [0], [1], [0, 0, 1, 1], [], []>} : vector<8x64xf32>, vector<64x64xf32>, vector<8x64xf32> -> vector<8x64xf32>
    %54 = vector.broadcast %4 : vector<1x64xf32> to vector<8x64xf32>
    %55 = arith.addf %53, %54 : vector<8x64xf32>
    %56 = vector.extract_strided_slice %2 {offsets = [56, 0], sizes = [8, 64], strides = [1, 1]} : vector<64x64xf32> to vector<8x64xf32>
    %57 = arith.addf %55, %56 : vector<8x64xf32>
    %58 = math.tanh %57 : vector<8x64xf32>
    %cst_17 = arith.constant dense<0.000000e+00> : vector<8x64xf32>
    %59 = tpu.matmul %58, %3, %cst_17 {dimension_numbers = #tpu.dot_dimension_numbers<[1], [0], [0], [1], [0, 0, 1, 1], [], []>} : vector<8x64xf32>, vector<64x64xf32>, vector<8x64xf32> -> vector<8x64xf32>
    %60 = vector.broadcast %4 : vector<1x64xf32> to vector<8x64xf32>
    %61 = arith.addf %59, %60 : vector<8x64xf32>
    %62 = math.tanh %61 : vector<8x64xf32>
    %c0_18 = arith.constant 0 : index
    %c0_19 = arith.constant 0 : index
    %63 = vector.load %arg4[%c0_18, %c0_19] : memref<1x64xf32, #tpu.memory_space<vmem>>, vector<1x64xf32>
    %64 = vector.broadcast %63 : vector<1x64xf32> to vector<8x64xf32>
    %65 = arith.mulf %62, %64 : vector<8x64xf32>
    %cst_20 = arith.constant dense<0.000000e+00> : vector<8xf32>
    %66 = vector.multi_reduction <add>, %65, %cst_20 [1] : vector<8x64xf32> to vector<8xf32>
    %67 = vector.shape_cast %66 : vector<8xf32> to vector<8x1xf32>
    %c0_21 = arith.constant 0 : index
    %c0_22 = arith.constant 0 : index
    %68 = vector.load %arg5[%c0_21, %c0_22] : memref<1x1xf32, #tpu.memory_space<vmem>>, vector<1x1xf32>
    %69 = vector.broadcast %68 : vector<1x1xf32> to vector<8x1xf32>
    %70 = arith.addf %67, %69 : vector<8x1xf32>
    %c0_23 = arith.constant 0 : index
    %c0_24 = arith.constant 0 : index
    %71 = vector.load %arg6[%c0_23, %c0_24] : memref<8x1xf32, #tpu.memory_space<vmem>>, vector<8x1xf32>
    tpu.vector_store %arg6[%c0_23, %c0_24], %70 {strides = array<i32>} : memref<8x1xf32, #tpu.memory_space<vmem>>, vector<8x1xf32>,
    return
  }
}

</mosaic_0001>

<llo_original>
// kernel: forecasting_model_forward.1
$region0: #{forecasting_model_forward.1}
  #allocation0 [shape = 'u32[]', space=smem, size = 0x4, offset = 0x4, fixed_abs, tag = 'smem constant byte address 0x4 - core index']
  #allocation1 [shape = 'u32[144,128]{1,0:T(1,128)}', space=vmem, size = 0x12000, scoped, tag = 'internal scratch']
  #allocation2 [shape = 'f32[1,1]{1,0:T(1,128)S(1)}', space=vmem, size = 0x200, scoped, tag = 'scoped memory for forecasting_model_forward.1']
  %s0 = inlined_call_operand.vmem [shape: f32[64,8], index: 0, kind: input, shape index: {}]
  %s1 = inlined_call_operand.vmem [shape: f32[8,64], index: 1, kind: input, shape index: {}]
  %s2 = inlined_call_operand.vmem [shape: f32[64,64], index: 2, kind: input, shape index: {}]
  %s3 = inlined_call_operand.vmem [shape: f32[1,64], index: 3, kind: input, shape index: {}]
  %s4 = inlined_call_operand.vmem [shape: f32[1,64], index: 4, kind: input, shape index: {}]
  %s5 = inlined_call_operand.<no memory space> [shape: f32[1,1], index: 5, kind: input, shape index: {}]
  %s6 = inlined_call_operand.vmem [shape: f32[8,1], index: 6, kind: output, shape index: {}]
  %s7 = sld [smem:[#allocation0]]
  $region34: #{forecasting_model_forward.1} parent=0
    _
  %s9 = ssub.s32 1, %s7
  %s10 = scalar_select 0, %s9, %s7
  %v11 = vstv %s5
  %12 = vst [vmem:[#allocation2] sm:$0x1] %v11
  // Predicated region
  $region2: #{forecasting_model_forward.1} parent=0 // pred_check
    _
  $region3: #{forecasting_model_forward.1} parent=0 // pred_check_branch
    %14 = sbr.rel (0) target = $region5
  $region4: #{forecasting_model_forward.1} parent=0 // pred_region
    _
  $region5: #{forecasting_model_forward.1} parent=0 // pred_fallthru
    _
  // Predicated region
  $region6: #{forecasting_model_forward.1} parent=0 // pred_check
    _
  $region7: #{forecasting_model_forward.1} parent=0 // pred_check_branch
    %16 = sbr.rel (0) target = $region9
  $region8: #{forecasting_model_forward.1} parent=0 // pred_region
    _
  $region9: #{forecasting_model_forward.1} parent=0 // pred_fallthru
    _
  // Predicated region
  $region10: #{forecasting_model_forward.1} parent=0 // pred_check
    _
  $region11: #{forecasting_model_forward.1} parent=0 // pred_check_branch
    %18 = sbr.rel (0) target = $region13
  $region12: #{forecasting_model_forward.1} parent=0 // pred_region
    _
  $region13: #{forecasting_model_forward.1} parent=0 // pred_fallthru
    _
  // Predicated region
  $region14: #{forecasting_model_forward.1} parent=0 // pred_check
    _
  $region15: #{forecasting_model_forward.1} parent=0 // pred_check_branch
    %20 = sbr.rel (0) target = $region17
  $region16: #{forecasting_model_forward.1} parent=0 // pred_region
    _
  $region17: #{forecasting_model_forward.1} parent=0 // pred_fallthru
    _
  // Predicated region
  $region18: #{forecasting_model_forward.1} parent=0 // pred_check
    _
  $region19: #{forecasting_model_forward.1} parent=0 // pred_check_branch
    %22 = sbr.rel (0) target = $region21
  $region20: #{forecasting_model_forward.1} parent=0 // pred_region
    _
  $region21: #{forecasting_model_forward.1} parent=0 // pred_fallthru
    _
  // Predicated region
  $region22: #{forecasting_model_forward.1} parent=0 // pred_check
    _
  $region23: #{forecasting_model_forward.1} parent=0 // pred_check_branch
    %24 = sbr.rel (0) target = $region25
  $region24: #{forecasting_model_forward.1} parent=0 // pred_region
    _
  $region25: #{forecasting_model_forward.1} parent=0 // pred_fallthru
    _
  %v25 = vld [vmem:[%s0] sm:$0xff]
  %v26 = vld [vmem:[%s0 + $0x8] sm:$0xff]
  %v27 = vld [vmem:[%s0 + $0x10] sm:$0xff]
  %v28 = vld [vmem:[%s0 + $0x18] sm:$0xff]
  %v29 = vld [vmem:[%s0 + $0x20] sm:$0xff]
  %v30 = vld [vmem:[%s0 + $0x28] sm:$0xff]
  %v31 = vld [vmem:[%s0 + $0x30] sm:$0xff]
  %v32 = vld [vmem:[%s0 + $0x38] sm:$0xff]
  %v33 = vld [vmem:[%s1] sm:$0xff]
  %vm34 = vcmask 64512
  %v36 = vsel %vm34, %v25, 0
  %v39 = vsel %vm34, %v26, 0
  %v42 = vsel %vm34, %v27, 0
  %v45 = vsel %vm34, %v28, 0
  %v48 = vsel %vm34, %v29, 0
  %v51 = vsel %vm34, %v30, 0
  %v54 = vsel %vm34, %v31, 0
  %v57 = vsel %vm34, %v32, 0
  %59 = vmatprep.subr.mxu0 0.0
  %60 = vmatpush1.msra.mxu0 %v33
  %61 = vmatprep.subr.mxu0 0.0
  %62 = vmatpush1.msra.mxu0 0.0
  %63 = vmatprep.subr.mxu0 0.0
  %64 = vmatpush1.msra.mxu0 0.0
  %65 = vmatprep.subr.mxu0 0.0
  %66 = vmatpush1.msra.mxu0 0.0
  %67 = vmatprep.subr.mxu0 0.0
  %68 = vmatpush1.msra.mxu0 0.0
  %69 = vmatprep.subr.mxu0 0.0
  %70 = vmatpush1.msra.mxu0 0.0
  %71 = vmatprep.subr.mxu0 0.0
  %72 = vmatpush1.msra.mxu0 0.0
  %73 = vmatprep.subr.mxu0 0.0
  %74 = vmatpush1.msra.mxu0 0.0
  %75 = vmatprep.subr.mxu0 0.0
  %76 = vmatpush1.msra.mxu0 0.0
  %77 = vmatprep.subr.mxu0 0.0
  %78 = vmatpush1.msra.mxu0 0.0
  %79 = vmatprep.subr.mxu0 0.0
  %80 = vmatpush1.msra.mxu0 0.0
  %81 = vmatprep.subr.mxu0 0.0
  %82 = vmatpush1.msra.mxu0 0.0
  %83 = vmatprep.subr.mxu0 0.0
  %84 = vmatpush1.msra.mxu0 0.0
  %85 = vmatprep.subr.mxu0 0.0
  %86 = vmatpush1.msra.mxu0 0.0
  %87 = vmatprep.subr.mxu0 0.0
  %88 = vmatpush1.msra.mxu0 0.0
  %89 = vmatprep.subr.mxu0 0.0
  %90 = vmatpush1.msra.mxu0 0.0
  %91 = vmatprep.subr.mxu0 0.0
  %92 = vmatpush1.msra.mxu0 0.0
  %93 = vmatprep.subr.mxu0 0.0
  %94 = vmatpush1.msra.mxu0 0.0
  %95 = vmatprep.subr.mxu0 0.0
  %96 = vmatpush1.msra.mxu0 0.0
  %97 = vmatprep.subr.mxu0 0.0
  %98 = vmatpush1.msra.mxu0 0.0
  %99 = vmatprep.subr.mxu0 0.0
  %100 = vmatpush1.msra.mxu0 0.0
  %101 = vmatprep.subr.mxu0 0.0
  %102 = vmatpush1.msra.mxu0 0.0
  %103 = vmatprep.subr.mxu0 0.0
  %104 = vmatpush1.msra.mxu0 0.0
  %105 = vmatprep.subr.mxu0 0.0
  %106 = vmatpush1.msra.mxu0 0.0
  %107 = vmatprep.subr.mxu0 0.0
  %108 = vmatpush1.msra.mxu0 0.0
  %109 = vmatprep.subr.mxu0 0.0
  %110 = vmatpush1.msra.mxu0 0.0
  %111 = vmatprep.subr.mxu0 0.0
  %112 = vmatpush1.msra.mxu0 0.0
  %113 = vmatprep.subr.mxu0 0.0
  %114 = vmatpush1.msra.mxu0 0.0
  %115 = vmatprep.subr.mxu0 0.0
  %116 = vmatpush1.msra.mxu0 0.0
  %117 = vmatprep.subr.mxu0 0.0
  %118 = vmatpush1.msra.mxu0 0.0
  %119 = vmatprep.subr.mxu0 0.0
  %120 = vmatpush1.msra.mxu0 0.0
  %121 = vmatprep.subr.mxu0 0.0
  %122 = vmatpush1.msra.mxu0 0.0
  %123 = vmatprep.mubr.f32.mxu0 0.0
  %124 = vmatmul.mubr.f32.gmra.mrb[0].mxu0 %v36
  %v125 = vpop.f32.mrb[0].mxu0
  %v126 = vadd.f32 0.0, %v125
  %v127 = vpop.f32.mrb[0].mxu0
  %128 = vmatprep.mubr.f32.mxu0 0.0
  %129 = vmatmul.mubr.f32.gmra.mrb[0].mxu0 %v39
  %v130 = vpop.f32.mrb[0].mxu0
  %v131 = vadd.f32 0.0, %v130
  %v132 = vpop.f32.mrb[0].mxu0
  %133 = vmatprep.mubr.f32.mxu0 0.0
  %134 = vmatmul.mubr.f32.gmra.mrb[0].mxu0 %v42
  %v135 = vpop.f32.mrb[0].mxu0
  %v136 = vadd.f32 0.0, %v135
  %v137 = vpop.f32.mrb[0].mxu0
  %138 = vmatprep.mubr.f32.mxu0 0.0
  %139 = vmatmul.mubr.f32.gmra.mrb[0].mxu0 %v45
  %v140 = vpop.f32.mrb[0].mxu0
  %v141 = vadd.f32 0.0, %v140
  %v142 = vpop.f32.mrb[0].mxu0
  %143 = vmatprep.mubr.f32.mxu0 0.0
  %144 = vmatmul.mubr.f32.gmra.mrb[0].mxu0 %v48
  %v145 = vpop.f32.mrb[0].mxu0
  %v146 = vadd.f32 0.0, %v145
  %v147 = vpop.f32.mrb[0].mxu0
  %148 = vmatprep.mubr.f32.mxu0 0.0
  %149 = vmatmul.mubr.f32.gmra.mrb[0].mxu0 %v51
  %v150 = vpop.f32.mrb[0].mxu0
  %v151 = vadd.f32 0.0, %v150
  %v152 = vpop.f32.mrb[0].mxu0
  %153 = vmatprep.mubr.f32.mxu0 0.0
  %154 = vmatmul.mubr.f32.gmra.mrb[0].mxu0 %v54
  %v155 = vpop.f32.mrb[0].mxu0
  %v156 = vadd.f32 0.0, %v155
  %v157 = vpop.f32.mrb[0].mxu0
  %158 = vmatprep.mubr.f32.mxu0 0.0
  %159 = vmatmul.mubr.f32.gmra.mrb[0].mxu0 %v57
  %v160 = vpop.f32.mrb[0].mxu0
  %v161 = vadd.f32 0.0, %v160
  %v162 = vpop.f32.mrb[0].mxu0
  %163 = vdwg.mxu0
  %v164 = vld [vmem:[%s2] sm:$0xff]
  %v165 = vld [vmem:[%s2 + $0x8] sm:$0xff]
  %v166 = vld [vmem:[%s2 + $0x10] sm:$0xff]
  %v167 = vld [vmem:[%s2 + $0x18] sm:$0xff]
  %v168 = vld [vmem:[%s2 + $0x20] sm:$0xff]
  %v169 = vld [vmem:[%s2 + $0x28] sm:$0xff]
  %v170 = vld [vmem:[%s2 + $0x30] sm:$0xff]
  %v171 = vld [vmem:[%s2 + $0x38] sm:$0xff]
  %v172 = vld [vmem:[%s3] sm:$0x1]
  %v174 = vlaneseq
  %v175 = vshrl.u32 %v174, 7
  %v176 = vsub.s32 0, %v175
  %v177 = vrot.slane %v172, %v176
  %vm179 = vcmask 523264
  %v181 = vsel %vm179, 0.0, 0
  %183 = vmatprep.subr.mxu0 0.0
  %184 = vmatpush1.msra.mxu0 %v164
  %185 = vmatprep.subr.mxu0 0.0
  %186 = vmatpush1.msra.mxu0 %v165
  %187 = vmatprep.subr.mxu0 0.0
  %188 = vmatpush1.msra.mxu0 %v166
  %189 = vmatprep.subr.mxu0 0.0
  %190 = vmatpush1.msra.mxu0 %v167
  %191 = vmatprep.subr.mxu0 0.0
  %192 = vmatpush1.msra.mxu0 %v168
  %193 = vmatprep.subr.mxu0 0.0
  %194 = vmatpush1.msra.mxu0 %v169
  %195 = vmatprep.subr.mxu0 0.0
  %196 = vmatpush1.msra.mxu0 %v170
  %197 = vmatprep.subr.mxu0 0.0
  %198 = vmatpush1.msra.mxu0 %v171
  %199 = vmatprep.subr.mxu0 0.0
  %200 = vmatpush1.msra.mxu0 0.0
  %201 = vmatprep.subr.mxu0 0.0
  %202 = vmatpush1.msra.mxu0 0.0
  %203 = vmatprep.subr.mxu0 0.0
  %204 = vmatpush1.msra.mxu0 0.0
  %205 = vmatprep.subr.mxu0 0.0
  %206 = vmatpush1.msra.mxu0 0.0
  %207 = vmatprep.subr.mxu0 0.0
  %208 = vmatpush1.msra.mxu0 0.0
  %209 = vmatprep.subr.mxu0 0.0
  %210 = vmatpush1.msra.mxu0 0.0
  %211 = vmatprep.subr.mxu0 0.0
  %212 = vmatpush1.msra.mxu0 0.0
  %213 = vmatprep.subr.mxu0 0.0
  %214 = vmatpush1.msra.mxu0 0.0
  %215 = vmatprep.subr.mxu0 0.0
  %216 = vmatpush1.msra.mxu0 0.0
  %217 = vmatprep.subr.mxu0 0.0
  %218 = vmatpush1.msra.mxu0 0.0
  %219 = vmatprep.subr.mxu0 0.0
  %220 = vmatpush1.msra.mxu0 0.0
  %221 = vmatprep.subr.mxu0 0.0
  %222 = vmatpush1.msra.mxu0 0.0
  %223 = vmatprep.subr.mxu0 0.0
  %224 = vmatpush1.msra.mxu0 0.0
  %225 = vmatprep.subr.mxu0 0.0
  %226 = vmatpush1.msra.mxu0 0.0
  %227 = vmatprep.subr.mxu0 0.0
  %228 = vmatpush1.msra.mxu0 0.0
  %229 = vmatprep.subr.mxu0 0.0
  %230 = vmatpush1.msra.mxu0 0.0
  %231 = vmatprep.subr.mxu0 0.0
  %232 = vmatpush1.msra.mxu0 0.0
  %233 = vmatprep.subr.mxu0 0.0
  %234 = vmatpush1.msra.mxu0 0.0
  %235 = vmatprep.subr.mxu0 0.0
  %236 = vmatpush1.msra.mxu0 0.0
  %237 = vmatprep.subr.mxu0 0.0
  %238 = vmatpush1.msra.mxu0 0.0
  %239 = vmatprep.subr.mxu0 0.0
  %240 = vmatpush1.msra.mxu0 0.0
  %241 = vmatprep.subr.mxu0 0.0
  %242 = vmatpush1.msra.mxu0 0.0
  %243 = vmatprep.subr.mxu0 0.0
  %244 = vmatpush1.msra.mxu0 0.0
  %245 = vmatprep.subr.mxu0 0.0
  %246 = vmatpush1.msra.mxu0 0.0
  %247 = vmatprep.mubr.f32.mxu0 0.0
  %248 = vmatmul.mubr.f32.gmra.mrb[0].mxu0 %v181
  %v249 = vpop.f32.mrb[0].mxu0
  %v250 = vadd.f32 %v177, %v249
  %v251 = vpop.f32.mrb[0].mxu0
  %252 = vdwg.mxu0
  %v253 = vadd.f32 %v250, %v126
  %v254 = vtanh.pop %v253
  %v255 = vlaneseq
  %v256 = vand.u32 %v255, 127
  %vm257 = vcmp.lt.s32.totalorder %v256, 32
  %v258 = vsel %vm257, %v254, 0.0
  %v260 = vsel %vm179, %v258, 0
  %262 = vmatprep.subr.mxu0 0.0
  %263 = vmatpush1.msra.mxu0 %v164
  %264 = vmatprep.subr.mxu0 0.0
  %265 = vmatpush1.msra.mxu0 %v165
  %266 = vmatprep.subr.mxu0 0.0
  %267 = vmatpush1.msra.mxu0 %v166
  %268 = vmatprep.subr.mxu0 0.0
  %269 = vmatpush1.msra.mxu0 %v167
  %270 = vmatprep.subr.mxu0 0.0
  %271 = vmatpush1.msra.mxu0 %v168
  %272 = vmatprep.subr.mxu0 0.0
  %273 = vmatpush1.msra.mxu0 %v169
  %274 = vmatprep.subr.mxu0 0.0
  %275 = vmatpush1.msra.mxu0 %v170
  %276 = vmatprep.subr.mxu0 0.0
  %277 = vmatpush1.msra.mxu0 %v171
  %278 = vmatprep.subr.mxu0 0.0
  %279 = vmatpush1.msra.mxu0 0.0
  %280 = vmatprep.subr.mxu0 0.0
  %281 = vmatpush1.msra.mxu0 0.0
  %282 = vmatprep.subr.mxu0 0.0
  %283 = vmatpush1.msra.mxu0 0.0
  %284 = vmatprep.subr.mxu0 0.0
  %285 = vmatpush1.msra.mxu0 0.0
  %286 = vmatprep.subr.mxu0 0.0
  %287 = vmatpush1.msra.mxu0 0.0
  %288 = vmatprep.subr.mxu0 0.0
  %289 = vmatpush1.msra.mxu0 0.0
  %290 = vmatprep.subr.mxu0 0.0
  %291 = vmatpush1.msra.mxu0 0.0
  %292 = vmatprep.subr.mxu0 0.0
  %293 = vmatpush1.msra.mxu0 0.0
  %294 = vmatprep.subr.mxu0 0.0
  %295 = vmatpush1.msra.mxu0 0.0
  %296 = vmatprep.subr.mxu0 0.0
  %297 = vmatpush1.msra.mxu0 0.0
  %298 = vmatprep.subr.mxu0 0.0
  %299 = vmatpush1.msra.mxu0 0.0
  %300 = vmatprep.subr.mxu0 0.0
  %301 = vmatpush1.msra.mxu0 0.0
  %302 = vmatprep.subr.mxu0 0.0
  %303 = vmatpush1.msra.mxu0 0.0
  %304 = vmatprep.subr.mxu0 0.0
  %305 = vmatpush1.msra.mxu0 0.0
  %306 = vmatprep.subr.mxu0 0.0
  %307 = vmatpush1.msra.mxu0 0.0
  %308 = vmatprep.subr.mxu0 0.0
  %309 = vmatpush1.msra.mxu0 0.0
  %310 = vmatprep.subr.mxu0 0.0
  %311 = vmatpush1.msra.mxu0 0.0
  %312 = vmatprep.subr.mxu0 0.0
  %313 = vmatpush1.msra.mxu0 0.0
  %314 = vmatprep.subr.mxu0 0.0
  %315 = vmatpush1.msra.mxu0 0.0
  %316 = vmatprep.subr.mxu0 0.0
  %317 = vmatpush1.msra.mxu0 0.0
  %318 = vmatprep.subr.mxu0 0.0
  %319 = vmatpush1.msra.mxu0 0.0
  %320 = vmatprep.subr.mxu0 0.0
  %321 = vmatpush1.msra.mxu0 0.0
  %322 = vmatprep.subr.mxu0 0.0
  %323 = vmatpush1.msra.mxu0 0.0
  %324 = vmatprep.subr.mxu0 0.0
  %325 = vmatpush1.msra.mxu0 0.0
  %326 = vmatprep.mubr.f32.mxu0 0.0
  %327 = vmatmul.mubr.f32.gmra.mrb[0].mxu0 %v260
  %v328 = vpop.f32.mrb[0].mxu0
  %v329 = vadd.f32 %v177, %v328
  %v330 = vpop.f32.mrb[0].mxu0
  %331 = vdwg.mxu0
  %v332 = vadd.f32 %v329, %v131
  %v333 = vtanh.pop %v332
  %v335 = vsel %vm179, %v333, 0
  %337 = vmatprep.subr.mxu0 0.0
  %338 = vmatpush1.msra.mxu0 %v164
  %339 = vmatprep.subr.mxu0 0.0
  %340 = vmatpush1.msra.mxu0 %v165
  %341 = vmatprep.subr.mxu0 0.0
  %342 = vmatpush1.msra.mxu0 %v166
  %343 = vmatprep.subr.mxu0 0.0
  %344 = vmatpush1.msra.mxu0 %v167
  %345 = vmatprep.subr.mxu0 0.0
  %346 = vmatpush1.msra.mxu0 %v168
  %347 = vmatprep.subr.mxu0 0.0
  %348 = vmatpush1.msra.mxu0 %v169
  %349 = vmatprep.subr.mxu0 0.0
  %350 = vmatpush1.msra.mxu0 %v170
  %351 = vmatprep.subr.mxu0 0.0
  %352 = vmatpush1.msra.mxu0 %v171
  %353 = vmatprep.subr.mxu0 0.0
  %354 = vmatpush1.msra.mxu0 0.0
  %355 = vmatprep.subr.mxu0 0.0
  %356 = vmatpush1.msra.mxu0 0.0
  %357 = vmatprep.subr.mxu0 0.0
  %358 = vmatpush1.msra.mxu0 0.0
  %359 = vmatprep.subr.mxu0 0.0
  %360 = vmatpush1.msra.mxu0 0.0
  %361 = vmatprep.subr.mxu0 0.0
  %362 = vmatpush1.msra.mxu0 0.0
  %363 = vmatprep.subr.mxu0 0.0
  %364 = vmatpush1.msra.mxu0 0.0
  %365 = vmatprep.subr.mxu0 0.0
  %366 = vmatpush1.msra.mxu0 0.0
  %367 = vmatprep.subr.mxu0 0.0
  %368 = vmatpush1.msra.mxu0 0.0
  %369 = vmatprep.subr.mxu0 0.0
  %370 = vmatpush1.msra.mxu0 0.0
  %371 = vmatprep.subr.mxu0 0.0
  %372 = vmatpush1.msra.mxu0 0.0
  %373 = vmatprep.subr.mxu0 0.0
  %374 = vmatpush1.msra.mxu0 0.0
  %375 = vmatprep.subr.mxu0 0.0
  %376 = vmatpush1.msra.mxu0 0.0
  %377 = vmatprep.subr.mxu0 0.0
  %378 = vmatpush1.msra.mxu0 0.0
  %379 = vmatprep.subr.mxu0 0.0
  %380 = vmatpush1.msra.mxu0 0.0
  %381 = vmatprep.subr.mxu0 0.0
  %382 = vmatpush1.msra.mxu0 0.0
  %383 = vmatprep.subr.mxu0 0.0
  %384 = vmatpush1.msra.mxu0 0.0
  %385 = vmatprep.subr.mxu0 0.0
  %386 = vmatpush1.msra.mxu0 0.0
  %387 = vmatprep.subr.mxu0 0.0
  %388 = vmatpush1.msra.mxu0 0.0
  %389 = vmatprep.subr.mxu0 0.0
  %390 = vmatpush1.msra.mxu0 0.0
  %391 = vmatprep.subr.mxu0 0.0
  %392 = vmatpush1.msra.mxu0 0.0
  %393 = vmatprep.subr.mxu0 0.0
  %394 = vmatpush1.msra.mxu0 0.0
  %395 = vmatprep.subr.mxu0 0.0
  %396 = vmatpush1.msra.mxu0 0.0
  %397 = vmatprep.subr.mxu0 0.0
  %398 = vmatpush1.msra.mxu0 0.0
  %399 = vmatprep.subr.mxu0 0.0
  %400 = vmatpush1.msra.mxu0 0.0
  %401 = vmatprep.mubr.f32.mxu0 0.0
  %402 = vmatmul.mubr.f32.gmra.mrb[0].mxu0 %v335
  %v403 = vpop.f32.mrb[0].mxu0
  %v404 = vadd.f32 %v177, %v403
  %v405 = vpop.f32.mrb[0].mxu0
  %406 = vdwg.mxu0
  %v407 = vadd.f32 %v404, %v136
  %v408 = vtanh.pop %v407
  %v410 = vsel %vm179, %v408, 0
  %412 = vmatprep.subr.mxu0 0.0
  %413 = vmatpush1.msra.mxu0 %v164
  %414 = vmatprep.subr.mxu0 0.0
  %415 = vmatpush1.msra.mxu0 %v165
  %416 = vmatprep.subr.mxu0 0.0
  %417 = vmatpush1.msra.mxu0 %v166
  %418 = vmatprep.subr.mxu0 0.0
  %419 = vmatpush1.msra.mxu0 %v167
  %420 = vmatprep.subr.mxu0 0.0
  %421 = vmatpush1.msra.mxu0 %v168
  %422 = vmatprep.subr.mxu0 0.0
  %423 = vmatpush1.msra.mxu0 %v169
  %424 = vmatprep.subr.mxu0 0.0
  %425 = vmatpush1.msra.mxu0 %v170
  %426 = vmatprep.subr.mxu0 0.0
  %427 = vmatpush1.msra.mxu0 %v171
  %428 = vmatprep.subr.mxu0 0.0
  %429 = vmatpush1.msra.mxu0 0.0
  %430 = vmatprep.subr.mxu0 0.0
  %431 = vmatpush1.msra.mxu0 0.0
  %432 = vmatprep.subr.mxu0 0.0
  %433 = vmatpush1.msra.mxu0 0.0
  %434 = vmatprep.subr.mxu0 0.0
  %435 = vmatpush1.msra.mxu0 0.0
  %436 = vmatprep.subr.mxu0 0.0
  %437 = vmatpush1.msra.mxu0 0.0
  %438 = vmatprep.subr.mxu0 0.0
  %439 = vmatpush1.msra.mxu0 0.0
  %440 = vmatprep.subr.mxu0 0.0
  %441 = vmatpush1.msra.mxu0 0.0
  %442 = vmatprep.subr.mxu0 0.0
  %443 = vmatpush1.msra.mxu0 0.0
  %444 = vmatprep.subr.mxu0 0.0
  %445 = vmatpush1.msra.mxu0 0.0
  %446 = vmatprep.subr.mxu0 0.0
  %447 = vmatpush1.msra.mxu0 0.0
  %448 = vmatprep.subr.mxu0 0.0
  %449 = vmatpush1.msra.mxu0 0.0
  %450 = vmatprep.subr.mxu0 0.0
  %451 = vmatpush1.msra.mxu0 0.0
  %452 = vmatprep.subr.mxu0 0.0
  %453 = vmatpush1.msra.mxu0 0.0
  %454 = vmatprep.subr.mxu0 0.0
  %455 = vmatpush1.msra.mxu0 0.0
  %456 = vmatprep.subr.mxu0 0.0
  %457 = vmatpush1.msra.mxu0 0.0
  %458 = vmatprep.subr.mxu0 0.0
  %459 = vmatpush1.msra.mxu0 0.0
  %460 = vmatprep.subr.mxu0 0.0
  %461 = vmatpush1.msra.mxu0 0.0
  %462 = vmatprep.subr.mxu0 0.0
  %463 = vmatpush1.msra.mxu0 0.0
  %464 = vmatprep.subr.mxu0 0.0
  %465 = vmatpush1.msra.mxu0 0.0
  %466 = vmatprep.subr.mxu0 0.0
  %467 = vmatpush1.msra.mxu0 0.0
  %468 = vmatprep.subr.mxu0 0.0
  %469 = vmatpush1.msra.mxu0 0.0
  %470 = vmatprep.subr.mxu0 0.0
  %471 = vmatpush1.msra.mxu0 0.0
  %472 = vmatprep.subr.mxu0 0.0
  %473 = vmatpush1.msra.mxu0 0.0
  %474 = vmatprep.subr.mxu0 0.0
  %475 = vmatpush1.msra.mxu0 0.0
  %476 = vmatprep.mubr.f32.mxu0 0.0
  %477 = vmatmul.mubr.f32.gmra.mrb[0].mxu0 %v410
  %v478 = vpop.f32.mrb[0].mxu0
  %v479 = vadd.f32 %v177, %v478
  %v480 = vpop.f32.mrb[0].mxu0
  %481 = vdwg.mxu0
  %v482 = vadd.f32 %v479, %v141
  %v483 = vtanh.pop %v482
  %v485 = vsel %vm179, %v483, 0
  %487 = vmatprep.subr.mxu0 0.0
  %488 = vmatpush1.msra.mxu0 %v164
  %489 = vmatprep.subr.mxu0 0.0
  %490 = vmatpush1.msra.mxu0 %v165
  %491 = vmatprep.subr.mxu0 0.0
  %492 = vmatpush1.msra.mxu0 %v166
  %493 = vmatprep.subr.mxu0 0.0
  %494 = vmatpush1.msra.mxu0 %v167
  %495 = vmatprep.subr.mxu0 0.0
  %496 = vmatpush1.msra.mxu0 %v168
  %497 = vmatprep.subr.mxu0 0.0
  %498 = vmatpush1.msra.mxu0 %v169
  %499 = vmatprep.subr.mxu0 0.0
  %500 = vmatpush1.msra.mxu0 %v170
  %501 = vmatprep.subr.mxu0 0.0
  %502 = vmatpush1.msra.mxu0 %v171
  %503 = vmatprep.subr.mxu0 0.0
  %504 = vmatpush1.msra.mxu0 0.0
  %505 = vmatprep.subr.mxu0 0.0
  %506 = vmatpush1.msra.mxu0 0.0
  %507 = vmatprep.subr.mxu0 0.0
  %508 = vmatpush1.msra.mxu0 0.0
  %509 = vmatprep.subr.mxu0 0.0
  %510 = vmatpush1.msra.mxu0 0.0
  %511 = vmatprep.subr.mxu0 0.0
  %512 = vmatpush1.msra.mxu0 0.0
  %513 = vmatprep.subr.mxu0 0.0
  %514 = vmatpush1.msra.mxu0 0.0
  %515 = vmatprep.subr.mxu0 0.0
  %516 = vmatpush1.msra.mxu0 0.0
  %517 = vmatprep.subr.mxu0 0.0
  %518 = vmatpush1.msra.mxu0 0.0
  %519 = vmatprep.subr.mxu0 0.0
  %520 = vmatpush1.msra.mxu0 0.0
  %521 = vmatprep.subr.mxu0 0.0
  %522 = vmatpush1.msra.mxu0 0.0
  %523 = vmatprep.subr.mxu0 0.0
  %524 = vmatpush1.msra.mxu0 0.0
  %525 = vmatprep.subr.mxu0 0.0
  %526 = vmatpush1.msra.mxu0 0.0
  %527 = vmatprep.subr.mxu0 0.0
  %528 = vmatpush1.msra.mxu0 0.0
  %529 = vmatprep.subr.mxu0 0.0
  %530 = vmatpush1.msra.mxu0 0.0
  %531 = vmatprep.subr.mxu0 0.0
  %532 = vmatpush1.msra.mxu0 0.0
  %533 = vmatprep.subr.mxu0 0.0
  %534 = vmatpush1.msra.mxu0 0.0
  %535 = vmatprep.subr.mxu0 0.0
  %536 = vmatpush1.msra.mxu0 0.0
  %537 = vmatprep.subr.mxu0 0.0
  %538 = vmatpush1.msra.mxu0 0.0
  %539 = vmatprep.subr.mxu0 0.0
  %540 = vmatpush1.msra.mxu0 0.0
  %541 = vmatprep.subr.mxu0 0.0
  %542 = vmatpush1.msra.mxu0 0.0
  %543 = vmatprep.subr.mxu0 0.0
  %544 = vmatpush1.msra.mxu0 0.0
  %545 = vmatprep.subr.mxu0 0.0
  %546 = vmatpush1.msra.mxu0 0.0
  %547 = vmatprep.subr.mxu0 0.0
  %548 = vmatpush1.msra.mxu0 0.0
  %549 = vmatprep.subr.mxu0 0.0
  %550 = vmatpush1.msra.mxu0 0.0
  %551 = vmatprep.mubr.f32.mxu0 0.0
  %552 = vmatmul.mubr.f32.gmra.mrb[0].mxu0 %v485
  %v553 = vpop.f32.mrb[0].mxu0
  %v554 = vadd.f32 %v177, %v553
  %v555 = vpop.f32.mrb[0].mxu0
  %556 = vdwg.mxu0
  %v557 = vadd.f32 %v554, %v146
  %v558 = vtanh.pop %v557
  %v560 = vsel %vm179, %v558, 0
  %562 = vmatprep.subr.mxu0 0.0
  %563 = vmatpush1.msra.mxu0 %v164
  %564 = vmatprep.subr.mxu0 0.0
  %565 = vmatpush1.msra.mxu0 %v165
  %566 = vmatprep.subr.mxu0 0.0
  %567 = vmatpush1.msra.mxu0 %v166
  %568 = vmatprep.subr.mxu0 0.0
  %569 = vmatpush1.msra.mxu0 %v167
  %570 = vmatprep.subr.mxu0 0.0
  %571 = vmatpush1.msra.mxu0 %v168
  %572 = vmatprep.subr.mxu0 0.0
  %573 = vmatpush1.msra.mxu0 %v169
  %574 = vmatprep.subr.mxu0 0.0
  %575 = vmatpush1.msra.mxu0 %v170
  %576 = vmatprep.subr.mxu0 0.0
  %577 = vmatpush1.msra.mxu0 %v171
  %578 = vmatprep.subr.mxu0 0.0
  %579 = vmatpush1.msra.mxu0 0.0
  %580 = vmatprep.subr.mxu0 0.0
  %581 = vmatpush1.msra.mxu0 0.0
  %582 = vmatprep.subr.mxu0 0.0
  %583 = vmatpush1.msra.mxu0 0.0
  %584 = vmatprep.subr.mxu0 0.0
  %585 = vmatpush1.msra.mxu0 0.0
  %586 = vmatprep.subr.mxu0 0.0
  %587 = vmatpush1.msra.mxu0 0.0
  %588 = vmatprep.subr.mxu0 0.0
  %589 = vmatpush1.msra.mxu0 0.0
  %590 = vmatprep.subr.mxu0 0.0
  %591 = vmatpush1.msra.mxu0 0.0
  %592 = vmatprep.subr.mxu0 0.0
  %593 = vmatpush1.msra.mxu0 0.0
  %594 = vmatprep.subr.mxu0 0.0
  %595 = vmatpush1.msra.mxu0 0.0
  %596 = vmatprep.subr.mxu0 0.0
  %597 = vmatpush1.msra.mxu0 0.0
  %598 = vmatprep.subr.mxu0 0.0
  %599 = vmatpush1.msra.mxu0 0.0
  %600 = vmatprep.subr.mxu0 0.0
  %601 = vmatpush1.msra.mxu0 0.0
  %602 = vmatprep.subr.mxu0 0.0
  %603 = vmatpush1.msra.mxu0 0.0
  %604 = vmatprep.subr.mxu0 0.0
  %605 = vmatpush1.msra.mxu0 0.0
  %606 = vmatprep.subr.mxu0 0.0
  %607 = vmatpush1.msra.mxu0 0.0
  %608 = vmatprep.subr.mxu0 0.0
  %609 = vmatpush1.msra.mxu0 0.0
  %610 = vmatprep.subr.mxu0 0.0
  %611 = vmatpush1.msra.mxu0 0.0
  %612 = vmatprep.subr.mxu0 0.0
  %613 = vmatpush1.msra.mxu0 0.0
  %614 = vmatprep.subr.mxu0 0.0
  %615 = vmatpush1.msra.mxu0 0.0
  %616 = vmatprep.subr.mxu0 0.0
  %617 = vmatpush1.msra.mxu0 0.0
  %618 = vmatprep.subr.mxu0 0.0
  %619 = vmatpush1.msra.mxu0 0.0
  %620 = vmatprep.subr.mxu0 0.0
  %621 = vmatpush1.msra.mxu0 0.0
  %622 = vmatprep.subr.mxu0 0.0
  %623 = vmatpush1.msra.mxu0 0.0
  %624 = vmatprep.subr.mxu0 0.0
  %625 = vmatpush1.msra.mxu0 0.0
  %626 = vmatprep.mubr.f32.mxu0 0.0
  %627 = vmatmul.mubr.f32.gmra.mrb[0].mxu0 %v560
  %v628 = vpop.f32.mrb[0].mxu0
  %v629 = vadd.f32 %v177, %v628
  %v630 = vpop.f32.mrb[0].mxu0
  %631 = vdwg.mxu0
  %v632 = vadd.f32 %v629, %v151
  %v633 = vtanh.pop %v632
  %v635 = vsel %vm179, %v633, 0
  %637 = vmatprep.subr.mxu0 0.0
  %638 = vmatpush1.msra.mxu0 %v164
  %639 = vmatprep.subr.mxu0 0.0
  %640 = vmatpush1.msra.mxu0 %v165
  %641 = vmatprep.subr.mxu0 0.0
  %642 = vmatpush1.msra.mxu0 %v166
  %643 = vmatprep.subr.mxu0 0.0
  %644 = vmatpush1.msra.mxu0 %v167
  %645 = vmatprep.subr.mxu0 0.0
  %646 = vmatpush1.msra.mxu0 %v168
  %647 = vmatprep.subr.mxu0 0.0
  %648 = vmatpush1.msra.mxu0 %v169
  %649 = vmatprep.subr.mxu0 0.0
  %650 = vmatpush1.msra.mxu0 %v170
  %651 = vmatprep.subr.mxu0 0.0
  %652 = vmatpush1.msra.mxu0 %v171
  %653 = vmatprep.subr.mxu0 0.0
  %654 = vmatpush1.msra.mxu0 0.0
  %655 = vmatprep.subr.mxu0 0.0
  %656 = vmatpush1.msra.mxu0 0.0
  %657 = vmatprep.subr.mxu0 0.0
  %658 = vmatpush1.msra.mxu0 0.0
  %659 = vmatprep.subr.mxu0 0.0
  %660 = vmatpush1.msra.mxu0 0.0
  %661 = vmatprep.subr.mxu0 0.0
  %662 = vmatpush1.msra.mxu0 0.0
  %663 = vmatprep.subr.mxu0 0.0
  %664 = vmatpush1.msra.mxu0 0.0
  %665 = vmatprep.subr.mxu0 0.0
  %666 = vmatpush1.msra.mxu0 0.0
  %667 = vmatprep.subr.mxu0 0.0
  %668 = vmatpush1.msra.mxu0 0.0
  %669 = vmatprep.subr.mxu0 0.0
  %670 = vmatpush1.msra.mxu0 0.0
  %671 = vmatprep.subr.mxu0 0.0
  %672 = vmatpush1.msra.mxu0 0.0
  %673 = vmatprep.subr.mxu0 0.0
  %674 = vmatpush1.msra.mxu0 0.0
  %675 = vmatprep.subr.mxu0 0.0
  %676 = vmatpush1.msra.mxu0 0.0
  %677 = vmatprep.subr.mxu0 0.0
  %678 = vmatpush1.msra.mxu0 0.0
  %679 = vmatprep.subr.mxu0 0.0
  %680 = vmatpush1.msra.mxu0 0.0
  %681 = vmatprep.subr.mxu0 0.0
  %682 = vmatpush1.msra.mxu0 0.0
  %683 = vmatprep.subr.mxu0 0.0
  %684 = vmatpush1.msra.mxu0 0.0
  %685 = vmatprep.subr.mxu0 0.0
  %686 = vmatpush1.msra.mxu0 0.0
  %687 = vmatprep.subr.mxu0 0.0
  %688 = vmatpush1.msra.mxu0 0.0
  %689 = vmatprep.subr.mxu0 0.0
  %690 = vmatpush1.msra.mxu0 0.0
  %691 = vmatprep.subr.mxu0 0.0
  %692 = vmatpush1.msra.mxu0 0.0
  %693 = vmatprep.subr.mxu0 0.0
  %694 = vmatpush1.msra.mxu0 0.0
  %695 = vmatprep.subr.mxu0 0.0
  %696 = vmatpush1.msra.mxu0 0.0
  %697 = vmatprep.subr.mxu0 0.0
  %698 = vmatpush1.msra.mxu0 0.0
  %699 = vmatprep.subr.mxu0 0.0
  %700 = vmatpush1.msra.mxu0 0.0
  %701 = vmatprep.mubr.f32.mxu0 0.0
  %702 = vmatmul.mubr.f32.gmra.mrb[0].mxu0 %v635
  %v703 = vpop.f32.mrb[0].mxu0
  %v704 = vadd.f32 %v177, %v703
  %v705 = vpop.f32.mrb[0].mxu0
  %706 = vdwg.mxu0
  %v707 = vadd.f32 %v704, %v156
  %v708 = vtanh.pop %v707
  %v710 = vsel %vm179, %v708, 0
  %712 = vmatprep.subr.mxu0 0.0
  %713 = vmatpush1.msra.mxu0 %v164
  %714 = vmatprep.subr.mxu0 0.0
  %715 = vmatpush1.msra.mxu0 %v165
  %716 = vmatprep.subr.mxu0 0.0
  %717 = vmatpush1.msra.mxu0 %v166
  %718 = vmatprep.subr.mxu0 0.0
  %719 = vmatpush1.msra.mxu0 %v167
  %720 = vmatprep.subr.mxu0 0.0
  %721 = vmatpush1.msra.mxu0 %v168
  %722 = vmatprep.subr.mxu0 0.0
  %723 = vmatpush1.msra.mxu0 %v169
  %724 = vmatprep.subr.mxu0 0.0
  %725 = vmatpush1.msra.mxu0 %v170
  %726 = vmatprep.subr.mxu0 0.0
  %727 = vmatpush1.msra.mxu0 %v171
  %728 = vmatprep.subr.mxu0 0.0
  %729 = vmatpush1.msra.mxu0 0.0
  %730 = vmatprep.subr.mxu0 0.0
  %731 = vmatpush1.msra.mxu0 0.0
  %732 = vmatprep.subr.mxu0 0.0
  %733 = vmatpush1.msra.mxu0 0.0
  %734 = vmatprep.subr.mxu0 0.0
  %735 = vmatpush1.msra.mxu0 0.0
  %736 = vmatprep.subr.mxu0 0.0
  %737 = vmatpush1.msra.mxu0 0.0
  %738 = vmatprep.subr.mxu0 0.0
  %739 = vmatpush1.msra.mxu0 0.0
  %740 = vmatprep.subr.mxu0 0.0
  %741 = vmatpush1.msra.mxu0 0.0
  %742 = vmatprep.subr.mxu0 0.0
  %743 = vmatpush1.msra.mxu0 0.0
  %744 = vmatprep.subr.mxu0 0.0
  %745 = vmatpush1.msra.mxu0 0.0
  %746 = vmatprep.subr.mxu0 0.0
  %747 = vmatpush1.msra.mxu0 0.0
  %748 = vmatprep.subr.mxu0 0.0
  %749 = vmatpush1.msra.mxu0 0.0
  %750 = vmatprep.subr.mxu0 0.0
  %751 = vmatpush1.msra.mxu0 0.0
  %752 = vmatprep.subr.mxu0 0.0
  %753 = vmatpush1.msra.mxu0 0.0
  %754 = vmatprep.subr.mxu0 0.0
  %755 = vmatpush1.msra.mxu0 0.0
  %756 = vmatprep.subr.mxu0 0.0
  %757 = vmatpush1.msra.mxu0 0.0
  %758 = vmatprep.subr.mxu0 0.0
  %759 = vmatpush1.msra.mxu0 0.0
  %760 = vmatprep.subr.mxu0 0.0
  %761 = vmatpush1.msra.mxu0 0.0
  %762 = vmatprep.subr.mxu0 0.0
  %763 = vmatpush1.msra.mxu0 0.0
  %764 = vmatprep.subr.mxu0 0.0
  %765 = vmatpush1.msra.mxu0 0.0
  %766 = vmatprep.subr.mxu0 0.0
  %767 = vmatpush1.msra.mxu0 0.0
  %768 = vmatprep.subr.mxu0 0.0
  %769 = vmatpush1.msra.mxu0 0.0
  %770 = vmatprep.subr.mxu0 0.0
  %771 = vmatpush1.msra.mxu0 0.0
  %772 = vmatprep.subr.mxu0 0.0
  %773 = vmatpush1.msra.mxu0 0.0
  %774 = vmatprep.subr.mxu0 0.0
  %775 = vmatpush1.msra.mxu0 0.0
  %776 = vmatprep.mubr.f32.mxu0 0.0
  %777 = vmatmul.mubr.f32.gmra.mrb[0].mxu0 %v710
  %v778 = vpop.f32.mrb[0].mxu0
  %v779 = vadd.f32 %v177, %v778
  %v780 = vpop.f32.mrb[0].mxu0
  %781 = vdwg.mxu0
  %v782 = vadd.f32 %v779, %v161
  %v783 = vtanh.pop %v782
  %v785 = vsel %vm179, %v783, 0
  %787 = vmatprep.subr.mxu0 0.0
  %788 = vmatpush1.msra.mxu0 %v164
  %789 = vmatprep.subr.mxu0 0.0
  %790 = vmatpush1.msra.mxu0 %v165
  %791 = vmatprep.subr.mxu0 0.0
  %792 = vmatpush1.msra.mxu0 %v166
  %793 = vmatprep.subr.mxu0 0.0
  %794 = vmatpush1.msra.mxu0 %v167
  %795 = vmatprep.subr.mxu0 0.0
  %796 = vmatpush1.msra.mxu0 %v168
  %797 = vmatprep.subr.mxu0 0.0
  %798 = vmatpush1.msra.mxu0 %v169
  %799 = vmatprep.subr.mxu0 0.0
  %800 = vmatpush1.msra.mxu0 %v170
  %801 = vmatprep.subr.mxu0 0.0
  %802 = vmatpush1.msra.mxu0 %v171
  %803 = vmatprep.subr.mxu0 0.0
  %804 = vmatpush1.msra.mxu0 0.0
  %805 = vmatprep.subr.mxu0 0.0
  %806 = vmatpush1.msra.mxu0 0.0
  %807 = vmatprep.subr.mxu0 0.0
  %808 = vmatpush1.msra.mxu0 0.0
  %809 = vmatprep.subr.mxu0 0.0
  %810 = vmatpush1.msra.mxu0 0.0
  %811 = vmatprep.subr.mxu0 0.0
  %812 = vmatpush1.msra.mxu0 0.0
  %813 = vmatprep.subr.mxu0 0.0
  %814 = vmatpush1.msra.mxu0 0.0
  %815 = vmatprep.subr.mxu0 0.0
  %816 = vmatpush1.msra.mxu0 0.0
  %817 = vmatprep.subr.mxu0 0.0
  %818 = vmatpush1.msra.mxu0 0.0
  %819 = vmatprep.subr.mxu0 0.0
  %820 = vmatpush1.msra.mxu0 0.0
  %821 = vmatprep.subr.mxu0 0.0
  %822 = vmatpush1.msra.mxu0 0.0
  %823 = vmatprep.subr.mxu0 0.0
  %824 = vmatpush1.msra.mxu0 0.0
  %825 = vmatprep.subr.mxu0 0.0
  %826 = vmatpush1.msra.mxu0 0.0
  %827 = vmatprep.subr.mxu0 0.0
  %828 = vmatpush1.msra.mxu0 0.0
  %829 = vmatprep.subr.mxu0 0.0
  %830 = vmatpush1.msra.mxu0 0.0
  %831 = vmatprep.subr.mxu0 0.0
  %832 = vmatpush1.msra.mxu0 0.0
  %833 = vmatprep.subr.mxu0 0.0
  %834 = vmatpush1.msra.mxu0 0.0
  %835 = vmatprep.subr.mxu0 0.0
  %836 = vmatpush1.msra.mxu0 0.0
  %837 = vmatprep.subr.mxu0 0.0
  %838 = vmatpush1.msra.mxu0 0.0
  %839 = vmatprep.subr.mxu0 0.0
  %840 = vmatpush1.msra.mxu0 0.0
  %841 = vmatprep.subr.mxu0 0.0
  %842 = vmatpush1.msra.mxu0 0.0
  %843 = vmatprep.subr.mxu0 0.0
  %844 = vmatpush1.msra.mxu0 0.0
  %845 = vmatprep.subr.mxu0 0.0
  %846 = vmatpush1.msra.mxu0 0.0
  %847 = vmatprep.subr.mxu0 0.0
  %848 = vmatpush1.msra.mxu0 0.0
  %849 = vmatprep.subr.mxu0 0.0
  %850 = vmatpush1.msra.mxu0 0.0
  %851 = vmatprep.mubr.f32.mxu0 0.0
  %852 = vmatmul.mubr.f32.gmra.mrb[0].mxu0 %v785
  %v853 = vpop.f32.mrb[0].mxu0
  %v854 = vadd.f32 %v177, %v853
  %v855 = vpop.f32.mrb[0].mxu0
  %856 = vdwg.mxu0
  %v857 = vtanh.pop %v854
  %v858 = vld [vmem:[%s4] sm:$0x1]
  %v860 = vlaneseq
  %v861 = vshrl.u32 %v860, 7
  %v862 = vsub.s32 0, %v861
  %v863 = vrot.slane %v858, %v862
  %v865 = vmul.f32 %v857, %v863
  %v866 = vsel %vm179, %v865, 0.0
  %867 = vadd.xlane.f32.xlu0 %v866
  %v868 = vpop.xlane.xlu0 %867
  %v869 = vld [vmem:[#allocation2] sm:$0x1]
  %v871 = vlaneseq
  %v872 = vshrl.u32 %v871, 7
  %v873 = vsub.s32 0, %v872
  %v874 = vrot.slane %v869, %v873
  %v876 = vadd.f32 %v868, %v874
  %vm877 = vcmask 7168
  %878 = vst.msk [vmem:[%s6] sm:$0xff] %vm877, %v876
  // Predicated region
  $region26: #{forecasting_model_forward.1} parent=0 // pred_check
    _
  $region27: #{forecasting_model_forward.1} parent=0 // pred_check_branch
    %880 = sbr.rel (0) target = $region29
  $region28: #{forecasting_model_forward.1} parent=0 // pred_region
    _
  $region29: #{forecasting_model_forward.1} parent=0 // pred_fallthru
    _
  // Predicated region
  $region30: #{forecasting_model_forward.1} parent=0 // pred_check
    _
  $region31: #{forecasting_model_forward.1} parent=0 // pred_check_branch
    %882 = sbr.rel (0) target = $region33
  $region32: #{forecasting_model_forward.1} parent=0 // pred_region
    _
  $region33: #{forecasting_model_forward.1} parent=0 // pred_fallthru
    _

</llo_original>
